<compile_context>
chip_gen: v7x
topology: tpu7x:2x2x1
jax: 0.10.0
libtpu: 0.0.40
codegen_flags: <defaults>
</compile_context>

<pallas_src>
import jax
import jax.numpy as jnp
from jax.experimental import pallas as pl
from jax.experimental.pallas import tpu as pltpu


def _vmem_capacity_bytes():
    """Physical VMEM per core, with a conservative fallback (v7x = 64 MiB)."""
    try:
        return int(pltpu.get_tpu_info().vmem_capacity_bytes)
    except Exception:
        return 64 * 1024 * 1024


def conv_bn_eval(x, w, b, running_mean, running_var, gamma, beta, *,
                 stride=1, eps=1e-5, compute_dtype=jnp.bfloat16,
                 out_dtype=jnp.float32, cout_block=256):
    """Fused Conv2d(+bias, VALID, stride=1) + BatchNorm2d(eval) forward.

    x: (N, Cin, H, W); w: (Cout, Cin, KH, KW); b/gamma/beta/mean/var: (Cout,).
    Returns (N, Cout, OH, OW) in out_dtype (NCHW).
    """
    N, Cin, H, W = x.shape
    Cout, Cin_w, KH, KW = w.shape
    assert Cin_w == Cin
    if stride != 1:
        # TODO(synk): stride > 1 needs strided lane windows in-kernel.
        raise NotImplementedError("only stride=1 (nn.Conv2d default) is supported")
    OH = H - KH + 1
    OW = W - KW + 1

    # ---- Fold BatchNorm (eval) + conv bias into effective weight / bias. ----
    inv_std = jax.lax.rsqrt(running_var.astype(jnp.float32) + eps)       # (Cout,)
    scale = gamma.astype(jnp.float32) * inv_std                          # (Cout,)
    w_f32 = w.astype(jnp.float32) * scale[:, None, None, None]           # (Cout,Cin,KH,KW)
    # (KH*KW, Cout, Cin): one (Cout, Cin) slab per kernel tap (kh*KW + kw).
    w_r = (w_f32.transpose(2, 3, 0, 1)
                 .reshape(KH * KW, Cout, Cin)
                 .astype(compute_dtype))
    b_eff = ((b.astype(jnp.float32) - running_mean.astype(jnp.float32)) * scale
             + beta.astype(jnp.float32)).reshape(Cout, 1)                # f32

    # x in (N, H, Cin, W): lanes = W, sublanes = Cin.  One cheap 1x pass over x
    # (this replaces the 9x im2col materialization + pad of the old version).
    x_r = x.astype(compute_dtype).transpose(0, 2, 1, 3)

    # Cout blocking (kicks in only for large layers; the test uses one block).
    if Cout > cout_block and Cout % cout_block == 0:
        tc = cout_block
    else:
        tc = Cout
    cb_steps = Cout // tc

    def kernel(x_ref, w_ref, b_ref, o_ref):
        # x_ref: (H, Cin, W)      -- whole image, resident across (cb, oh) steps
        # w_ref: (KH*KW, tc, Cin) -- BN-folded weights for this Cout block
        # b_ref: (tc, 1) f32      -- BN-folded bias
        # o_ref: (tc, OW)         -- one output row for this Cout block
        oh = pl.program_id(2)
        acc = jnp.zeros((tc, OW), jnp.float32)
        for kh in range(KH):                           # in-kernel im2col:
            xrow = x_ref[oh + kh]                      # (Cin, W), dynamic row
            for kw in range(KW):
                wk = w_ref[kh * KW + kw]               # (tc, Cin), static tap
                acc = acc + jnp.dot(wk, xrow[:, kw:kw + OW],
                                    preferred_element_type=jnp.float32)
        o_ref[...] = (acc + b_ref[...]).astype(o_ref.dtype)

    # ---- VMEM accounting: everything resident, x2 for double buffering. ----
    in_sz = jnp.dtype(compute_dtype).itemsize
    out_sz = jnp.dtype(out_dtype).itemsize
    resident = (2 * H * Cin * W * in_sz              # x image block
                + 2 * KH * KW * tc * Cin * in_sz     # folded weight block
                + 2 * tc * 4                         # folded bias (f32)
                + 2 * tc * OW * out_sz)              # output block
    vmem_cap = max(_vmem_capacity_bytes(), 48 * 1024 * 1024)
    vmem_limit = int(min(max(2 * resident + (4 << 20), 32 << 20),
                         int(0.9 * vmem_cap)))

    out = pl.pallas_call(
        kernel,
        out_shape=jax.ShapeDtypeStruct((N, OH, Cout, OW), out_dtype),
        grid=(N, cb_steps, OH),
        in_specs=[
            # Whole image; index depends only on n -> DMA'd once per image.
            pl.BlockSpec((None, H, Cin, W), lambda n, cb, oh: (n, 0, 0, 0)),
            # Per-tap folded weights for this Cout block.
            pl.BlockSpec((KH * KW, tc, Cin), lambda n, cb, oh: (0, cb, 0)),
            # Folded bias for this Cout block.
            pl.BlockSpec((tc, 1), lambda n, cb, oh: (cb, 0)),
        ],
        out_specs=pl.BlockSpec((None, None, tc, OW),
                               lambda n, cb, oh: (n, oh, cb, 0)),
        compiler_params=pltpu.CompilerParams(
            dimension_semantics=("parallel", "parallel", "parallel"),
            vmem_limit_bytes=vmem_limit),
    )(x_r, w_r, b_eff)

    # (N, OH, Cout, OW) -> NCHW.  Small tensor; the only remaining host relayout.
    return out.transpose(0, 2, 1, 3)


if __name__ == "__main__":
    # ConvOp(nn.Conv2d, nn.BatchNorm2d, use_bias=True, in_channels=4,
    #        out_channels=8, kernel_size=3) with a small NCHW input.
    N, Cin, H, W = 2, 4, 16, 16
    Cout, KH, KW = 8, 3, 3
    eps = 1e-5

    key = jax.random.PRNGKey(0)
    kx, kw_, kb, kg, kbt, km, kv = jax.random.split(key, 7)
    x = jax.random.normal(kx, (N, Cin, H, W), jnp.float32)
    w = jax.random.normal(kw_, (Cout, Cin, KH, KW), jnp.float32) * 0.1
    b = jax.random.normal(kb, (Cout,), jnp.float32) * 0.1
    gamma = 1.0 + 0.1 * jax.random.normal(kg, (Cout,), jnp.float32)
    beta = 0.1 * jax.random.normal(kbt, (Cout,), jnp.float32)
    running_mean = 0.1 * jax.random.normal(km, (Cout,), jnp.float32)
    running_var = jnp.abs(jax.random.normal(kv, (Cout,), jnp.float32)) + 0.5

    # Reference: lax conv (NCHW) + eval-mode BatchNorm, all f32.
    conv_ref = jax.lax.conv_general_dilated(
        x, w, window_strides=(1, 1), padding="VALID",
        dimension_numbers=("NCHW", "OIHW", "NCHW")) + b[None, :, None, None]
    bn_ref = ((conv_ref - running_mean[None, :, None, None])
              * jax.lax.rsqrt(running_var + eps)[None, :, None, None]
              * gamma[None, :, None, None] + beta[None, :, None, None])

    # f32 path: tight check that BN fold + in-kernel window indexing is exact.
    out_f32 = jax.block_until_ready(
        conv_bn_eval(x, w, b, running_mean, running_var, gamma, beta,
                     eps=eps, compute_dtype=jnp.float32))
    assert out_f32.shape == (N, Cout, H - KH + 1, W - KW + 1)
    assert jnp.allclose(out_f32, bn_ref, atol=1e-3, rtol=1e-3)

    # bf16 operand path (default perf config): looser tolerance for rounding.
    out_bf16 = jax.block_until_ready(
        conv_bn_eval(x, w, b, running_mean, running_var, gamma, beta, eps=eps))
    assert out_bf16.shape == (N, Cout, H - KH + 1, W - KW + 1)
    assert jnp.allclose(out_bf16, bn_ref, atol=5e-2, rtol=5e-2)

    print("KERNEL_OK")
</pallas_src>

<mosaic_0001>
module attributes {stable_mosaic.version = 11 : i64} {
  func.func @kernel(%arg0: i32, %arg1: i32, %arg2: i32, %arg3: memref<1x16x4x16xf32, #tpu.memory_space<vmem>>, %arg4: memref<9x8x4xf32, #tpu.memory_space<vmem>>, %arg5: memref<8x1xf32, #tpu.memory_space<vmem>>, %arg6: memref<1x1x8x14xf32, #tpu.memory_space<vmem>>) attributes {dimension_semantics = [#tpu.dimension_semantics<parallel>, #tpu.dimension_semantics<parallel>, #tpu.dimension_semantics<parallel>], iteration_bounds = array<i64: 2, 1, 14>, scalar_prefetch = 0 : i64, scratch_operands = 0 : i64, tpu.core_type = #tpu.core_type<tc>, window_params = [{transform_indices = @transform_0, window_bounds = array<i64: 1, 16, 4, 16>}, {transform_indices = @transform_1, window_bounds = array<i64: 9, 8, 4>}, {transform_indices = @transform_2, window_bounds = array<i64: 8, 1>}, {transform_indices = @transform_3, window_bounds = array<i64: 1, 1, 8, 14>}]} {
    %cst = arith.constant 0.000000e+00 : f32
    %0 = vector.broadcast %cst : f32 to vector<8x14xf32>
    %c0_i32 = arith.constant 0 : i32
    %1 = arith.addi %arg2, %c0_i32 : i32
    %c0 = arith.constant 0 : index
    %2 = arith.index_cast %1 : i32 to index
    %c0_0 = arith.constant 0 : index
    %c0_1 = arith.constant 0 : index
    %3 = vector.load %arg3[%c0, %2, %c0_0, %c0_1] : memref<1x16x4x16xf32, #tpu.memory_space<vmem>>, vector<1x1x4x16xf32>
    %4 = vector.shape_cast %3 : vector<1x1x4x16xf32> to vector<4x16xf32>
    %c0_2 = arith.constant 0 : index
    %c0_3 = arith.constant 0 : index
    %c0_4 = arith.constant 0 : index
    %5 = vector.load %arg4[%c0_2, %c0_3, %c0_4] : memref<9x8x4xf32, #tpu.memory_space<vmem>>, vector<1x8x4xf32>
    %6 = vector.shape_cast %5 : vector<1x8x4xf32> to vector<8x4xf32>
    %7 = vector.extract_strided_slice %4 {offsets = [0, 0], sizes = [4, 14], strides = [1, 1]} : vector<4x16xf32> to vector<4x14xf32>
    %cst_5 = arith.constant dense<0.000000e+00> : vector<8x14xf32>
    %8 = tpu.matmul %6, %7, %cst_5 {dimension_numbers = #tpu.dot_dimension_numbers<[1], [0], [0], [1], [0, 0, 1, 1], [], []>} : vector<8x4xf32>, vector<4x14xf32>, vector<8x14xf32> -> vector<8x14xf32>
    %9 = arith.addf %0, %8 : vector<8x14xf32>
    %c1 = arith.constant 1 : index
    %c0_6 = arith.constant 0 : index
    %c0_7 = arith.constant 0 : index
    %10 = vector.load %arg4[%c1, %c0_6, %c0_7] : memref<9x8x4xf32, #tpu.memory_space<vmem>>, vector<1x8x4xf32>
    %11 = vector.shape_cast %10 : vector<1x8x4xf32> to vector<8x4xf32>
    %12 = vector.extract_strided_slice %4 {offsets = [0, 1], sizes = [4, 14], strides = [1, 1]} : vector<4x16xf32> to vector<4x14xf32>
    %cst_8 = arith.constant dense<0.000000e+00> : vector<8x14xf32>
    %13 = tpu.matmul %11, %12, %cst_8 {dimension_numbers = #tpu.dot_dimension_numbers<[1], [0], [0], [1], [0, 0, 1, 1], [], []>} : vector<8x4xf32>, vector<4x14xf32>, vector<8x14xf32> -> vector<8x14xf32>
    %14 = arith.addf %9, %13 : vector<8x14xf32>
    %c2 = arith.constant 2 : index
    %c0_9 = arith.constant 0 : index
    %c0_10 = arith.constant 0 : index
    %15 = vector.load %arg4[%c2, %c0_9, %c0_10] : memref<9x8x4xf32, #tpu.memory_space<vmem>>, vector<1x8x4xf32>
    %16 = vector.shape_cast %15 : vector<1x8x4xf32> to vector<8x4xf32>
    %17 = vector.extract_strided_slice %4 {offsets = [0, 2], sizes = [4, 14], strides = [1, 1]} : vector<4x16xf32> to vector<4x14xf32>
    %cst_11 = arith.constant dense<0.000000e+00> : vector<8x14xf32>
    %18 = tpu.matmul %16, %17, %cst_11 {dimension_numbers = #tpu.dot_dimension_numbers<[1], [0], [0], [1], [0, 0, 1, 1], [], []>} : vector<8x4xf32>, vector<4x14xf32>, vector<8x14xf32> -> vector<8x14xf32>
    %19 = arith.addf %14, %18 : vector<8x14xf32>
    %c1_i32 = arith.constant 1 : i32
    %20 = arith.addi %arg2, %c1_i32 : i32
    %c0_12 = arith.constant 0 : index
    %21 = arith.index_cast %20 : i32 to index
    %c0_13 = arith.constant 0 : index
    %c0_14 = arith.constant 0 : index
    %22 = vector.load %arg3[%c0_12, %21, %c0_13, %c0_14] : memref<1x16x4x16xf32, #tpu.memory_space<vmem>>, vector<1x1x4x16xf32>
    %23 = vector.shape_cast %22 : vector<1x1x4x16xf32> to vector<4x16xf32>
    %c3 = arith.constant 3 : index
    %c0_15 = arith.constant 0 : index
    %c0_16 = arith.constant 0 : index
    %24 = vector.load %arg4[%c3, %c0_15, %c0_16] : memref<9x8x4xf32, #tpu.memory_space<vmem>>, vector<1x8x4xf32>
    %25 = vector.shape_cast %24 : vector<1x8x4xf32> to vector<8x4xf32>
    %26 = vector.extract_strided_slice %23 {offsets = [0, 0], sizes = [4, 14], strides = [1, 1]} : vector<4x16xf32> to vector<4x14xf32>
    %cst_17 = arith.constant dense<0.000000e+00> : vector<8x14xf32>
    %27 = tpu.matmul %25, %26, %cst_17 {dimension_numbers = #tpu.dot_dimension_numbers<[1], [0], [0], [1], [0, 0, 1, 1], [], []>} : vector<8x4xf32>, vector<4x14xf32>, vector<8x14xf32> -> vector<8x14xf32>
    %28 = arith.addf %19, %27 : vector<8x14xf32>
    %c4 = arith.constant 4 : index
    %c0_18 = arith.constant 0 : index
    %c0_19 = arith.constant 0 : index
    %29 = vector.load %arg4[%c4, %c0_18, %c0_19] : memref<9x8x4xf32, #tpu.memory_space<vmem>>, vector<1x8x4xf32>
    %30 = vector.shape_cast %29 : vector<1x8x4xf32> to vector<8x4xf32>
    %31 = vector.extract_strided_slice %23 {offsets = [0, 1], sizes = [4, 14], strides = [1, 1]} : vector<4x16xf32> to vector<4x14xf32>
    %cst_20 = arith.constant dense<0.000000e+00> : vector<8x14xf32>
    %32 = tpu.matmul %30, %31, %cst_20 {dimension_numbers = #tpu.dot_dimension_numbers<[1], [0], [0], [1], [0, 0, 1, 1], [], []>} : vector<8x4xf32>, vector<4x14xf32>, vector<8x14xf32> -> vector<8x14xf32>
    %33 = arith.addf %28, %32 : vector<8x14xf32>
    %c5 = arith.constant 5 : index
    %c0_21 = arith.constant 0 : index
    %c0_22 = arith.constant 0 : index
    %34 = vector.load %arg4[%c5, %c0_21, %c0_22] : memref<9x8x4xf32, #tpu.memory_space<vmem>>, vector<1x8x4xf32>
    %35 = vector.shape_cast %34 : vector<1x8x4xf32> to vector<8x4xf32>
    %36 = vector.extract_strided_slice %23 {offsets = [0, 2], sizes = [4, 14], strides = [1, 1]} : vector<4x16xf32> to vector<4x14xf32>
    %cst_23 = arith.constant dense<0.000000e+00> : vector<8x14xf32>
    %37 = tpu.matmul %35, %36, %cst_23 {dimension_numbers = #tpu.dot_dimension_numbers<[1], [0], [0], [1], [0, 0, 1, 1], [], []>} : vector<8x4xf32>, vector<4x14xf32>, vector<8x14xf32> -> vector<8x14xf32>
    %38 = arith.addf %33, %37 : vector<8x14xf32>
    %c2_i32 = arith.constant 2 : i32
    %39 = arith.addi %arg2, %c2_i32 : i32
    %c0_24 = arith.constant 0 : index
    %40 = arith.index_cast %39 : i32 to index
    %c0_25 = arith.constant 0 : index
    %c0_26 = arith.constant 0 : index
    %41 = vector.load %arg3[%c0_24, %40, %c0_25, %c0_26] : memref<1x16x4x16xf32, #tpu.memory_space<vmem>>, vector<1x1x4x16xf32>
    %42 = vector.shape_cast %41 : vector<1x1x4x16xf32> to vector<4x16xf32>
    %c6 = arith.constant 6 : index
    %c0_27 = arith.constant 0 : index
    %c0_28 = arith.constant 0 : index
    %43 = vector.load %arg4[%c6, %c0_27, %c0_28] : memref<9x8x4xf32, #tpu.memory_space<vmem>>, vector<1x8x4xf32>
    %44 = vector.shape_cast %43 : vector<1x8x4xf32> to vector<8x4xf32>
    %45 = vector.extract_strided_slice %42 {offsets = [0, 0], sizes = [4, 14], strides = [1, 1]} : vector<4x16xf32> to vector<4x14xf32>
    %cst_29 = arith.constant dense<0.000000e+00> : vector<8x14xf32>
    %46 = tpu.matmul %44, %45, %cst_29 {dimension_numbers = #tpu.dot_dimension_numbers<[1], [0], [0], [1], [0, 0, 1, 1], [], []>} : vector<8x4xf32>, vector<4x14xf32>, vector<8x14xf32> -> vector<8x14xf32>
    %47 = arith.addf %38, %46 : vector<8x14xf32>
    %c7 = arith.constant 7 : index
    %c0_30 = arith.constant 0 : index
    %c0_31 = arith.constant 0 : index
    %48 = vector.load %arg4[%c7, %c0_30, %c0_31] : memref<9x8x4xf32, #tpu.memory_space<vmem>>, vector<1x8x4xf32>
    %49 = vector.shape_cast %48 : vector<1x8x4xf32> to vector<8x4xf32>
    %50 = vector.extract_strided_slice %42 {offsets = [0, 1], sizes = [4, 14], strides = [1, 1]} : vector<4x16xf32> to vector<4x14xf32>
    %cst_32 = arith.constant dense<0.000000e+00> : vector<8x14xf32>
    %51 = tpu.matmul %49, %50, %cst_32 {dimension_numbers = #tpu.dot_dimension_numbers<[1], [0], [0], [1], [0, 0, 1, 1], [], []>} : vector<8x4xf32>, vector<4x14xf32>, vector<8x14xf32> -> vector<8x14xf32>
    %52 = arith.addf %47, %51 : vector<8x14xf32>
    %c8 = arith.constant 8 : index
    %c0_33 = arith.constant 0 : index
    %c0_34 = arith.constant 0 : index
    %53 = vector.load %arg4[%c8, %c0_33, %c0_34] : memref<9x8x4xf32, #tpu.memory_space<vmem>>, vector<1x8x4xf32>
    %54 = vector.shape_cast %53 : vector<1x8x4xf32> to vector<8x4xf32>
    %55 = vector.extract_strided_slice %42 {offsets = [0, 2], sizes = [4, 14], strides = [1, 1]} : vector<4x16xf32> to vector<4x14xf32>
    %cst_35 = arith.constant dense<0.000000e+00> : vector<8x14xf32>
    %56 = tpu.matmul %54, %55, %cst_35 {dimension_numbers = #tpu.dot_dimension_numbers<[1], [0], [0], [1], [0, 0, 1, 1], [], []>} : vector<8x4xf32>, vector<4x14xf32>, vector<8x14xf32> -> vector<8x14xf32>
    %57 = arith.addf %52, %56 : vector<8x14xf32>
    %c0_36 = arith.constant 0 : index
    %c0_37 = arith.constant 0 : index
    %58 = vector.load %arg5[%c0_36, %c0_37] : memref<8x1xf32, #tpu.memory_space<vmem>>, vector<8x1xf32>
    %59 = vector.broadcast %58 : vector<8x1xf32> to vector<8x14xf32>
    %60 = arith.addf %57, %59 : vector<8x14xf32>
    %c0_38 = arith.constant 0 : index
    %c0_39 = arith.constant 0 : index
    %c0_40 = arith.constant 0 : index
    %c0_41 = arith.constant 0 : index
    %61 = vector.load %arg6[%c0_38, %c0_39, %c0_40, %c0_41] : memref<1x1x8x14xf32, #tpu.memory_space<vmem>>, vector<1x1x8x14xf32>
    %62 = vector.shape_cast %61 : vector<1x1x8x14xf32> to vector<8x14xf32>
    %63 = vector.shape_cast %60 : vector<8x14xf32> to vector<1x1x8x14xf32>
    tpu.vector_store %arg6[%c0_38, %c0_39, %c0_40, %c0_41], %63 {strides = array<i32>} : memref<1x1x8x14xf32, #tpu.memory_space<vmem>>, vector<1x1x8x14xf32>,
    return
  }
  func.func @transform_0(%arg0: i32, %arg1: i32, %arg2: i32) -> (i32, i32, i32, i32) {
    %c0_i32 = arith.constant 0 : i32
    %c0_i32_0 = arith.constant 0 : i32
    %c0_i32_1 = arith.constant 0 : i32
    %c0_i32_2 = arith.constant 0 : i32
    return %arg0, %c0_i32, %c0_i32_0, %c0_i32_1 : i32, i32, i32, i32
  }
  func.func @transform_1(%arg0: i32, %arg1: i32, %arg2: i32) -> (i32, i32, i32) {
    %c0_i32 = arith.constant 0 : i32
    %c0_i32_0 = arith.constant 0 : i32
    %c0_i32_1 = arith.constant 0 : i32
    return %c0_i32, %arg1, %c0_i32_0 : i32, i32, i32
  }
  func.func @transform_2(%arg0: i32, %arg1: i32, %arg2: i32) -> (i32, i32) {
    %c0_i32 = arith.constant 0 : i32
    %c0_i32_0 = arith.constant 0 : i32
    return %arg1, %c0_i32 : i32, i32
  }
  func.func @transform_3(%arg0: i32, %arg1: i32, %arg2: i32) -> (i32, i32, i32, i32) {
    %c0_i32 = arith.constant 0 : i32
    %c0_i32_0 = arith.constant 0 : i32
    return %arg0, %arg2, %arg1, %c0_i32 : i32, i32, i32, i32
  }
}

</mosaic_0001>

<llo_original>
// kernel: tpu_custom_call.1
$region0: #{tpu_custom_call.1}
  #allocation0 [shape = 'u32[]', space=smem, size = 0x4, offset = 0x4, fixed_abs, tag = 'smem constant byte address 0x4 - core index']
  #allocation1 [shape = 'u32[144,128]{1,0:T(1,128)}', space=vmem, size = 0x12000, scoped, tag = 'internal scratch']
  %s0 = inlined_call_operand.hbm [shape: f32[2,16,4,16], index: 0, kind: input, shape index: {}]
  %s1 = inlined_call_operand.vmem [shape: f32[9,8,4], index: 1, kind: input, shape index: {}]
  %s2 = inlined_call_operand.vmem [shape: f32[8,1], index: 2, kind: input, shape index: {}]
  %s3 = inlined_call_operand.hbm [shape: f32[2,14,8,14], index: 3, kind: output, shape index: {}]
  %s4 = sld [smem:[#allocation0]]
  $region49: #{tpu_custom_call.1} parent=0
    _
  %s6 = ssub.s32 1, %s4
  %s7 = scalar_select 0, %s6, %s4
  $region1: #{tpu_custom_call.1} parent=0
    #allocation2 [shape = 'u8[65536]{0}', space=vmem, size = 0x10000, scoped, tag = 'input window, operand 0']
    #allocation3 [shape = 's32[2]{0}', space=sflag, size = 0x8, scoped, tag = 'scoped memory for tpu_custom_call.1']
    #allocation4 [shape = 's32[2]{0}', space=sflag, size = 0x8, scoped, tag = 'scoped memory for tpu_custom_call.1']
    #allocation5 [shape = 'u8[8192]{0}', space=vmem, size = 0x2000, scoped, tag = 'output window, operand 0']
    %8 = vsyncpa [#allocation3], 0
    %s9 = scalar_lea.sflag [#allocation3], 1
    %10 = vsyncpa %s9, 0
    %11 = vsyncpa [#allocation4], 0
    %s12 = scalar_lea.sflag [#allocation4], 1
    %13 = vsyncpa %s12, 0
    loop: start=0, step=1, limit=30
    $region2: #{tpu_custom_call.1} parent=1 // loop_pre_header
      _
    $region3: #{tpu_custom_call.1} parent=1 // loop_header
      %s15 = sphi 0, %s19
      %p16 = scmp.ge.s32.totalorder %s15, 30
      %s22 = sphi 0, %s41
      %s23 = sphi 0, %s37
      %s24 = sphi 0, %s33
      %s25 = sphi 0, %s22
      %s26 = sphi 0, %s23
      %s27 = sphi 0, %s24
      %s28 = sphi 0, %s25
      %s29 = sphi 0, %s26
      %s30 = sphi 0, %s27
      %s44 = sphi 0, %s46
      %s47 = sphi 0, %s44
      %s48 = sphi 0, %s47
      %s64 = sphi 0, %s48
      %s70 = sphi 0, %s72
      %s73 = sphi 0, %s70
      %s74 = sphi 0, %s73
      %s90 = sphi 0, %s74
      %s96 = sphi 0, %s98
      %s99 = sphi 0, %s96
      %s100 = sphi 0, %s99
      %s116 = sphi 0, %s100
      %s126 = sphi 0, %s128
      %s129 = sphi 0, %s126
      %s130 = sphi 0, %s129
      %s146 = sphi 0, %s130
    $region4: #{tpu_custom_call.1} parent=1 // loop_header_branch
      %18 = sbr.rel (%p16) target = $region8
    $region5: #{tpu_custom_call.1} parent=1 // loop_body
      %s20 = ssub.s32 %s15, 1
      %s21 = ssub.s32 %s15, 2
      %s31 = sadd.s32 1, %s24
      %p32 = scmp.ge.s32.totalorder %s31, 14
      %s33 = scalar_select %p32, 0, %s31
      %s34 = sadd.s32 1, %s23
      %s35 = scalar_select %p32, %s34, %s23
      %p36 = scmp.ge.s32.totalorder %s35, 1
      %s37 = scalar_select %p36, 0, %s35
      %s38 = sadd.s32 1, %s22
      %s39 = scalar_select %p36, %s38, %s22
      %p40 = scmp.ge.s32.totalorder %s39, 2
      %s41 = scalar_select %p40, 0, %s39
      %s42 = ssub.s32 %s22, %s41
      %p43 = scmp.eq.s32.totalorder %s42, 0
      %s45 = sadd.s32 %s44, 1
      %s46 = scalar_select %p43, %s44, %s45
      %p49 = pneg %p43
      %p50 = scmp.eq.s32.totalorder %s15, 27
      %p51 = por %p49, %p50
      %p52 = scmp.ne.s32.totalorder %s44, %s47
      %p53 = scmp.eq.s32.totalorder %s15, 0
      %p54 = por %p52, %p53
      %p55 = scmp.ne.s32.totalorder %s44, %s47
      %p56 = scmp.eq.s32.totalorder %s20, 27
      %p57 = por %p55, %p56
      %p58 = scmp.ne.s32.totalorder %s47, %s48
      %p59 = scmp.eq.s32.totalorder %s20, 0
      %p60 = por %p58, %p59
      %p61 = scmp.ne.s32.totalorder %s47, %s48
      %p62 = scmp.eq.s32.totalorder %s21, 27
      %p63 = por %p61, %p62
      %p65 = scmp.ne.s32.totalorder %s48, %s64
      %p66 = scmp.eq.s32.totalorder %s21, 0
      %p67 = por %p65, %p66
      %s68 = ssub.s32 %s23, %s37
      %p69 = scmp.eq.s32.totalorder %s68, 0
      %s71 = sadd.s32 %s70, 1
      %s72 = scalar_select %p69, %s70, %s71
      %p75 = pneg %p69
      %p76 = scmp.eq.s32.totalorder %s15, 27
      %p77 = por %p75, %p76
      %p78 = scmp.ne.s32.totalorder %s70, %s73
      %p79 = scmp.eq.s32.totalorder %s15, 0
      %p80 = por %p78, %p79
      %p81 = scmp.ne.s32.totalorder %s70, %s73
      %p82 = scmp.eq.s32.totalorder %s20, 27
      %p83 = por %p81, %p82
      %p84 = scmp.ne.s32.totalorder %s73, %s74
      %p85 = scmp.eq.s32.totalorder %s20, 0
      %p86 = por %p84, %p85
      %p87 = scmp.ne.s32.totalorder %s73, %s74
      %p88 = scmp.eq.s32.totalorder %s21, 27
      %p89 = por %p87, %p88
      %p91 = scmp.ne.s32.totalorder %s74, %s90
      %p92 = scmp.eq.s32.totalorder %s21, 0
      %p93 = por %p91, %p92
      %s94 = ssub.s32 %s23, %s37
      %p95 = scmp.eq.s32.totalorder %s94, 0
      %s97 = sadd.s32 %s96, 1
      %s98 = scalar_select %p95, %s96, %s97
      %p101 = pneg %p95
      %p102 = scmp.eq.s32.totalorder %s15, 27
      %p103 = por %p101, %p102
      %p104 = scmp.ne.s32.totalorder %s96, %s99
      %p105 = scmp.eq.s32.totalorder %s15, 0
      %p106 = por %p104, %p105
      %p107 = scmp.ne.s32.totalorder %s96, %s99
      %p108 = scmp.eq.s32.totalorder %s20, 27
      %p109 = por %p107, %p108
      %p110 = scmp.ne.s32.totalorder %s99, %s100
      %p111 = scmp.eq.s32.totalorder %s20, 0
      %p112 = por %p110, %p111
      %p113 = scmp.ne.s32.totalorder %s99, %s100
      %p114 = scmp.eq.s32.totalorder %s21, 27
      %p115 = por %p113, %p114
      %p117 = scmp.ne.s32.totalorder %s100, %s116
      %p118 = scmp.eq.s32.totalorder %s21, 0
      %p119 = por %p117, %p118
      %s120 = ssub.s32 %s22, %s41
      %s121 = ssub.s32 %s24, %s33
      %s122 = sor.u32 %s120, %s121
      %s123 = ssub.s32 %s23, %s37
      %s124 = sor.u32 %s122, %s123
      %p125 = scmp.eq.s32.totalorder %s124, 0
      %s127 = sadd.s32 %s126, 1
      %s128 = scalar_select %p125, %s126, %s127
      %p131 = pneg %p125
      %p132 = scmp.eq.s32.totalorder %s15, 27
      %p133 = por %p131, %p132
      %p134 = scmp.ne.s32.totalorder %s126, %s129
      %p135 = scmp.eq.s32.totalorder %s15, 0
      %p136 = por %p134, %p135
      %p137 = scmp.ne.s32.totalorder %s126, %s129
      %p138 = scmp.eq.s32.totalorder %s20, 27
      %p139 = por %p137, %p138
      %p140 = scmp.ne.s32.totalorder %s129, %s130
      %p141 = scmp.eq.s32.totalorder %s20, 0
      %p142 = por %p140, %p141
      %p143 = scmp.ne.s32.totalorder %s129, %s130
      %p144 = scmp.eq.s32.totalorder %s21, 27
      %p145 = por %p143, %p144
      %p147 = scmp.ne.s32.totalorder %s130, %s146
      %p148 = scmp.eq.s32.totalorder %s21, 0
      %p149 = por %p147, %p148
      %p150 = scmp.le.s32.totalorder 1, %s15
      %p151 = scmp.lt.s32.totalorder %s15, 29
      %p152 = pnand %p150, %p151
      %p153 = pneg %p152
      // Predicated region
      $region9: #{tpu_custom_call.1} parent=5 // pred_check
        _
      $region10: #{tpu_custom_call.1} parent=5 // pred_check_branch
        %155 = sbr.rel (%p152) target = $region12
      $region11: #{tpu_custom_call.1} parent=5 // pred_region
        %s156 = ssub.s32 %s15, 1
        // Predicated region
        $region13: #{tpu_custom_call.1} parent=11 // pred_check
          %p157 = pneg %p86
        $region14: #{tpu_custom_call.1} parent=11 // pred_check_branch
          %159 = sbr.rel (%p157) target = $region16
        $region15: #{tpu_custom_call.1} parent=11 // pred_region
          %p160 = scmp.lt.s32.totalorder %s26, 0
          %s161 = scalar_select %p160, %s26, 0
          %s162 = smul.addr %s161, 8
          %s163 = scalar_lea.vmem %s1, %s162
        $region16: #{tpu_custom_call.1} parent=11 // pred_fallthru
          _
        // Predicated region
        $region17: #{tpu_custom_call.1} parent=11 // pred_check
          %p164 = pneg %p112
        $region18: #{tpu_custom_call.1} parent=11 // pred_check_branch
          %166 = sbr.rel (%p164) target = $region20
        $region19: #{tpu_custom_call.1} parent=11 // pred_region
          %p167 = scmp.lt.s32.totalorder %s26, 0
          %s168 = scalar_select %p167, %s26, 0
          %s169 = smul.addr %s168, 8
          %s170 = scalar_lea.vmem %s2, %s169
        $region20: #{tpu_custom_call.1} parent=11 // pred_fallthru
          _
      $region12: #{tpu_custom_call.1} parent=5 // pred_fallthru
        _
      %p171 = scmp.lt.s32.totalorder %s15, 28
      // Predicated region
      $region21: #{tpu_custom_call.1} parent=5 // pred_check
        %p172 = pneg %p171
      $region22: #{tpu_custom_call.1} parent=5 // pred_check_branch
        %174 = sbr.rel (%p172) target = $region24
      $region23: #{tpu_custom_call.1} parent=5 // pred_region
        // Predicated region
        $region25: #{tpu_custom_call.1} parent=23 // pred_check
          %p175 = pneg %p54
        $region26: #{tpu_custom_call.1} parent=23 // pred_check_branch
          %177 = sbr.rel (%p175) target = $region28
        $region27: #{tpu_custom_call.1} parent=23 // pred_region
          %s178 = sand.u32 %s44, 1
          %s179 = scalar_lea.sflag [#allocation3], %s178
          %s180 = sand.u32 %s44, 1
          %s181 = smul.addr %s180, 64
          %s182 = scalar_lea.vmem [#allocation2], %s181
          %s184 = ssub.s32 1024, 1024
          %185 = vsyncadd %s179, %s184
          %s186 = smul.addr %s22, 16
          %s187 = smul.addr %s186, 64
          %s188 = scalar_lea.hbm %s0, %s187
          %s189 = sshll.u32 %s182, 4
          %s190 = int_to_ptr.vmem [resolvable:$true] %s189
          %195 = dma.hbm_to_vmem [thread:$0]  %s188, 1024, %s190, %s179, 64, 64, 4
        $region28: #{tpu_custom_call.1} parent=23 // pred_fallthru
          _
      $region24: #{tpu_custom_call.1} parent=5 // pred_fallthru
        _
      %p196 = scmp.le.s32.totalorder 1, %s15
      %p197 = scmp.lt.s32.totalorder %s15, 29
      %p198 = pnand %p196, %p197
      %p199 = pneg %p198
      // Predicated region
      $region29: #{tpu_custom_call.1} parent=5 // pred_check
        _
      $region30: #{tpu_custom_call.1} parent=5 // pred_check_branch
        %201 = sbr.rel (%p198) target = $region32
      $region31: #{tpu_custom_call.1} parent=5 // pred_region
        %s202 = ssub.s32 %s15, 1
        %s203 = sand.u32 %s47, 1
        %s204 = scalar_lea.sflag [#allocation3], %s203
        %s205 = sand.u32 %s47, 1
        %s206 = smul.addr %s205, 64
        %s207 = scalar_lea.vmem [#allocation2], %s206
        // Predicated region
        $region33: #{tpu_custom_call.1} parent=31 // pred_check
          %p208 = pneg %p60
        $region34: #{tpu_custom_call.1} parent=31 // pred_check_branch
          %210 = sbr.rel (%p208) target = $region36
        $region35: #{tpu_custom_call.1} parent=31 // pred_region
          %211 = dma.done %s204, 1024
        $region36: #{tpu_custom_call.1} parent=31 // pred_fallthru
          _
        %s212 = sand.u32 %s47, 1
        %s213 = scalar_lea.sflag [#allocation3], %s212
        %s214 = sand.u32 %s47, 1
        %s215 = smul.addr %s214, 64
        %s216 = scalar_lea.vmem [#allocation2], %s215
        %p217 = pneg %p60
        %p218 = pneg %p57
        %p219 = scmp.lt.s32.totalorder %s26, 0
        %s220 = scalar_select %p219, %s26, 0
        %s221 = smul.addr %s220, 8
        %s222 = scalar_lea.vmem %s1, %s221
        %p223 = pneg %p86
        %p224 = pneg %p83
        %p225 = scmp.lt.s32.totalorder %s26, 0
        %s226 = scalar_select %p225, %s26, 0
        %s227 = smul.addr %s226, 8
        %s228 = scalar_lea.vmem %s2, %s227
        %p229 = pneg %p112
        %p230 = pneg %p109
        %p231 = pneg %p142
        %p232 = pneg %p139
        %s233 = sand.u32 %s129, 1
        %s234 = scalar_lea.sflag [#allocation4], %s233
        %s235 = sand.u32 %s129, 1
        %s236 = smul.addr %s235, 8
        %s237 = scalar_lea.vmem [#allocation5], %s236
        %p238 = scmp.lt.s32.totalorder %s26, 0
        %s239 = scalar_select %p238, %s26, 0
        %s240 = smul.addr %s239, 8
        %s241 = scalar_lea.vmem %s1, %s240
        %p242 = scmp.lt.s32.totalorder %s26, 0
        %s243 = scalar_select %p242, %s26, 0
        %s244 = smul.addr %s243, 8
        %s245 = scalar_lea.vmem %s2, %s244
        %s246 = smul.u32 %s27, 4
        %s247 = scalar_lea.vmem %s207, %s246 [#allocation2]
        %v248 = vld [vmem:[%s247] sm:$0xf]
        %v249 = vld [vmem:[%s241] sm:$0xff]
        %s250 = scalar_lea.vmem %s241, 8
        %v251 = vld [vmem:[%s250] sm:$0xff]
        %253 = vrot.lane.b32.xlu0 %v248, 127
        %v254 = vpop.permute.xlu0 %253
        %vm255 = vcmask 31744
        %v257 = vsel %vm255, %v251, 0
        %vm259 = vcmask 1043456
        %v260 = vsel %vm259, %v254, 0
        %262 = vmatprep.subr.mxu0 0.0
        %263 = vmatpush1.msra.mxu0 %v260
        %264 = vmatprep.subr.mxu0 0.0
        %265 = vmatpush1.msra.mxu0 0.0
        %266 = vmatprep.subr.mxu0 0.0
        %267 = vmatpush1.msra.mxu0 0.0
        %268 = vmatprep.subr.mxu0 0.0
        %269 = vmatpush1.msra.mxu0 0.0
        %270 = vmatprep.subr.mxu0 0.0
        %271 = vmatpush1.msra.mxu0 0.0
        %272 = vmatprep.subr.mxu0 0.0
        %273 = vmatpush1.msra.mxu0 0.0
        %274 = vmatprep.subr.mxu0 0.0
        %275 = vmatpush1.msra.mxu0 0.0
        %276 = vmatprep.subr.mxu0 0.0
        %277 = vmatpush1.msra.mxu0 0.0
        %278 = vmatprep.subr.mxu0 0.0
        %279 = vmatpush1.msra.mxu0 0.0
        %280 = vmatprep.subr.mxu0 0.0
        %281 = vmatpush1.msra.mxu0 0.0
        %282 = vmatprep.subr.mxu0 0.0
        %283 = vmatpush1.msra.mxu0 0.0
        %284 = vmatprep.subr.mxu0 0.0
        %285 = vmatpush1.msra.mxu0 0.0
        %286 = vmatprep.subr.mxu0 0.0
        %287 = vmatpush1.msra.mxu0 0.0
        %288 = vmatprep.subr.mxu0 0.0
        %289 = vmatpush1.msra.mxu0 0.0
        %290 = vmatprep.subr.mxu0 0.0
        %291 = vmatpush1.msra.mxu0 0.0
        %292 = vmatprep.subr.mxu0 0.0
        %293 = vmatpush1.msra.mxu0 0.0
        %294 = vmatprep.subr.mxu0 0.0
        %295 = vmatpush1.msra.mxu0 0.0
        %296 = vmatprep.subr.mxu0 0.0
        %297 = vmatpush1.msra.mxu0 0.0
        %298 = vmatprep.subr.mxu0 0.0
        %299 = vmatpush1.msra.mxu0 0.0
        %300 = vmatprep.subr.mxu0 0.0
        %301 = vmatpush1.msra.mxu0 0.0
        %302 = vmatprep.subr.mxu0 0.0
        %303 = vmatpush1.msra.mxu0 0.0
        %304 = vmatprep.subr.mxu0 0.0
        %305 = vmatpush1.msra.mxu0 0.0
        %306 = vmatprep.subr.mxu0 0.0
        %307 = vmatpush1.msra.mxu0 0.0
        %308 = vmatprep.subr.mxu0 0.0
        %309 = vmatpush1.msra.mxu0 0.0
        %310 = vmatprep.subr.mxu0 0.0
        %311 = vmatpush1.msra.mxu0 0.0
        %312 = vmatprep.subr.mxu0 0.0
        %313 = vmatpush1.msra.mxu0 0.0
        %314 = vmatprep.subr.mxu0 0.0
        %315 = vmatpush1.msra.mxu0 0.0
        %316 = vmatprep.subr.mxu0 0.0
        %317 = vmatpush1.msra.mxu0 0.0
        %318 = vmatprep.subr.mxu0 0.0
        %319 = vmatpush1.msra.mxu0 0.0
        %320 = vmatprep.subr.mxu0 0.0
        %321 = vmatpush1.msra.mxu0 0.0
        %322 = vmatprep.subr.mxu0 0.0
        %323 = vmatpush1.msra.mxu0 0.0
        %324 = vmatprep.subr.mxu0 0.0
        %325 = vmatpush1.msra.mxu0 0.0
        %326 = vmatprep.mubr.f32.mxu0 0.0
        %327 = vmatmul.mubr.f32.gmra.mrb[0].mxu0 %v257
        %v328 = vpop.f32.mrb[0].mxu0
        %v329 = vadd.f32 0.0, %v328
        %v330 = vpop.f32.mrb[0].mxu0
        %331 = vdwg.mxu0
        %v333 = vsel %vm255, %v249, 0
        %v335 = vsel %vm259, %v248, 0
        %337 = vmatprep.subr.mxu0 0.0
        %338 = vmatpush1.msra.mxu0 %v335
        %339 = vmatprep.subr.mxu0 0.0
        %340 = vmatpush1.msra.mxu0 0.0
        %341 = vmatprep.subr.mxu0 0.0
        %342 = vmatpush1.msra.mxu0 0.0
        %343 = vmatprep.subr.mxu0 0.0
        %344 = vmatpush1.msra.mxu0 0.0
        %345 = vmatprep.subr.mxu0 0.0
        %346 = vmatpush1.msra.mxu0 0.0
        %347 = vmatprep.subr.mxu0 0.0
        %348 = vmatpush1.msra.mxu0 0.0
        %349 = vmatprep.subr.mxu0 0.0
        %350 = vmatpush1.msra.mxu0 0.0
        %351 = vmatprep.subr.mxu0 0.0
        %352 = vmatpush1.msra.mxu0 0.0
        %353 = vmatprep.subr.mxu0 0.0
        %354 = vmatpush1.msra.mxu0 0.0
        %355 = vmatprep.subr.mxu0 0.0
        %356 = vmatpush1.msra.mxu0 0.0
        %357 = vmatprep.subr.mxu0 0.0
        %358 = vmatpush1.msra.mxu0 0.0
        %359 = vmatprep.subr.mxu0 0.0
        %360 = vmatpush1.msra.mxu0 0.0
        %361 = vmatprep.subr.mxu0 0.0
        %362 = vmatpush1.msra.mxu0 0.0
        %363 = vmatprep.subr.mxu0 0.0
        %364 = vmatpush1.msra.mxu0 0.0
        %365 = vmatprep.subr.mxu0 0.0
        %366 = vmatpush1.msra.mxu0 0.0
        %367 = vmatprep.subr.mxu0 0.0
        %368 = vmatpush1.msra.mxu0 0.0
        %369 = vmatprep.subr.mxu0 0.0
        %370 = vmatpush1.msra.mxu0 0.0
        %371 = vmatprep.subr.mxu0 0.0
        %372 = vmatpush1.msra.mxu0 0.0
        %373 = vmatprep.subr.mxu0 0.0
        %374 = vmatpush1.msra.mxu0 0.0
        %375 = vmatprep.subr.mxu0 0.0
        %376 = vmatpush1.msra.mxu0 0.0
        %377 = vmatprep.subr.mxu0 0.0
        %378 = vmatpush1.msra.mxu0 0.0
        %379 = vmatprep.subr.mxu0 0.0
        %380 = vmatpush1.msra.mxu0 0.0
        %381 = vmatprep.subr.mxu0 0.0
        %382 = vmatpush1.msra.mxu0 0.0
        %383 = vmatprep.subr.mxu0 0.0
        %384 = vmatpush1.msra.mxu0 0.0
        %385 = vmatprep.subr.mxu0 0.0
        %386 = vmatpush1.msra.mxu0 0.0
        %387 = vmatprep.subr.mxu0 0.0
        %388 = vmatpush1.msra.mxu0 0.0
        %389 = vmatprep.subr.mxu0 0.0
        %390 = vmatpush1.msra.mxu0 0.0
        %391 = vmatprep.subr.mxu0 0.0
        %392 = vmatpush1.msra.mxu0 0.0
        %393 = vmatprep.subr.mxu0 0.0
        %394 = vmatpush1.msra.mxu0 0.0
        %395 = vmatprep.subr.mxu0 0.0
        %396 = vmatpush1.msra.mxu0 0.0
        %397 = vmatprep.subr.mxu0 0.0
        %398 = vmatpush1.msra.mxu0 0.0
        %399 = vmatprep.subr.mxu0 0.0
        %400 = vmatpush1.msra.mxu0 0.0
        %401 = vmatprep.mubr.f32.mxu0 0.0
        %402 = vmatmul.mubr.f32.gmra.mrb[0].mxu0 %v333
        %v403 = vpop.f32.mrb[0].mxu0
        %v404 = vadd.f32 %v329, %v403
        %v405 = vpop.f32.mrb[0].mxu0
        %406 = vdwg.mxu0
        %s407 = scalar_lea.vmem %s241, 16
        %v408 = vld [vmem:[%s407] sm:$0xff]
        %409 = vrot.lane.b32.xlu0 %v248, 126
        %v410 = vpop.permute.xlu0 %409
        %v412 = vsel %vm255, %v408, 0
        %v414 = vsel %vm259, %v410, 0
        %416 = vmatprep.subr.mxu0 0.0
        %417 = vmatpush1.msra.mxu0 %v414
        %418 = vmatprep.subr.mxu0 0.0
        %419 = vmatpush1.msra.mxu0 0.0
        %420 = vmatprep.subr.mxu0 0.0
        %421 = vmatpush1.msra.mxu0 0.0
        %422 = vmatprep.subr.mxu0 0.0
        %423 = vmatpush1.msra.mxu0 0.0
        %424 = vmatprep.subr.mxu0 0.0
        %425 = vmatpush1.msra.mxu0 0.0
        %426 = vmatprep.subr.mxu0 0.0
        %427 = vmatpush1.msra.mxu0 0.0
        %428 = vmatprep.subr.mxu0 0.0
        %429 = vmatpush1.msra.mxu0 0.0
        %430 = vmatprep.subr.mxu0 0.0
        %431 = vmatpush1.msra.mxu0 0.0
        %432 = vmatprep.subr.mxu0 0.0
        %433 = vmatpush1.msra.mxu0 0.0
        %434 = vmatprep.subr.mxu0 0.0
        %435 = vmatpush1.msra.mxu0 0.0
        %436 = vmatprep.subr.mxu0 0.0
        %437 = vmatpush1.msra.mxu0 0.0
        %438 = vmatprep.subr.mxu0 0.0
        %439 = vmatpush1.msra.mxu0 0.0
        %440 = vmatprep.subr.mxu0 0.0
        %441 = vmatpush1.msra.mxu0 0.0
        %442 = vmatprep.subr.mxu0 0.0
        %443 = vmatpush1.msra.mxu0 0.0
        %444 = vmatprep.subr.mxu0 0.0
        %445 = vmatpush1.msra.mxu0 0.0
        %446 = vmatprep.subr.mxu0 0.0
        %447 = vmatpush1.msra.mxu0 0.0
        %448 = vmatprep.subr.mxu0 0.0
        %449 = vmatpush1.msra.mxu0 0.0
        %450 = vmatprep.subr.mxu0 0.0
        %451 = vmatpush1.msra.mxu0 0.0
        %452 = vmatprep.subr.mxu0 0.0
        %453 = vmatpush1.msra.mxu0 0.0
        %454 = vmatprep.subr.mxu0 0.0
        %455 = vmatpush1.msra.mxu0 0.0
        %456 = vmatprep.subr.mxu0 0.0
        %457 = vmatpush1.msra.mxu0 0.0
        %458 = vmatprep.subr.mxu0 0.0
        %459 = vmatpush1.msra.mxu0 0.0
        %460 = vmatprep.subr.mxu0 0.0
        %461 = vmatpush1.msra.mxu0 0.0
        %462 = vmatprep.subr.mxu0 0.0
        %463 = vmatpush1.msra.mxu0 0.0
        %464 = vmatprep.subr.mxu0 0.0
        %465 = vmatpush1.msra.mxu0 0.0
        %466 = vmatprep.subr.mxu0 0.0
        %467 = vmatpush1.msra.mxu0 0.0
        %468 = vmatprep.subr.mxu0 0.0
        %469 = vmatpush1.msra.mxu0 0.0
        %470 = vmatprep.subr.mxu0 0.0
        %471 = vmatpush1.msra.mxu0 0.0
        %472 = vmatprep.subr.mxu0 0.0
        %473 = vmatpush1.msra.mxu0 0.0
        %474 = vmatprep.subr.mxu0 0.0
        %475 = vmatpush1.msra.mxu0 0.0
        %476 = vmatprep.subr.mxu0 0.0
        %477 = vmatpush1.msra.mxu0 0.0
        %478 = vmatprep.subr.mxu0 0.0
        %479 = vmatpush1.msra.mxu0 0.0
        %480 = vmatprep.mubr.f32.mxu0 0.0
        %481 = vmatmul.mubr.f32.gmra.mrb[0].mxu0 %v412
        %v482 = vpop.f32.mrb[0].mxu0
        %v483 = vadd.f32 0.0, %v482
        %v484 = vpop.f32.mrb[0].mxu0
        %485 = vdwg.mxu0
        %v486 = vadd.f32 %v404, %v483
        %s487 = sadd.s32 %s27, 1
        %s488 = smul.u32 %s487, 4
        %s489 = scalar_lea.vmem %s207, %s488 [#allocation2]
        %v490 = vld [vmem:[%s489] sm:$0xf]
        %s491 = scalar_lea.vmem %s241, 24
        %v492 = vld [vmem:[%s491] sm:$0xff]
        %v494 = vsel %vm255, %v492, 0
        %v497 = vsel %vm259, %v490, 0
        %499 = vmatprep.subr.mxu0 0.0
        %500 = vmatpush1.msra.mxu0 %v497
        %501 = vmatprep.subr.mxu0 0.0
        %502 = vmatpush1.msra.mxu0 0.0
        %503 = vmatprep.subr.mxu0 0.0
        %504 = vmatpush1.msra.mxu0 0.0
        %505 = vmatprep.subr.mxu0 0.0
        %506 = vmatpush1.msra.mxu0 0.0
        %507 = vmatprep.subr.mxu0 0.0
        %508 = vmatpush1.msra.mxu0 0.0
        %509 = vmatprep.subr.mxu0 0.0
        %510 = vmatpush1.msra.mxu0 0.0
        %511 = vmatprep.subr.mxu0 0.0
        %512 = vmatpush1.msra.mxu0 0.0
        %513 = vmatprep.subr.mxu0 0.0
        %514 = vmatpush1.msra.mxu0 0.0
        %515 = vmatprep.subr.mxu0 0.0
        %516 = vmatpush1.msra.mxu0 0.0
        %517 = vmatprep.subr.mxu0 0.0
        %518 = vmatpush1.msra.mxu0 0.0
        %519 = vmatprep.subr.mxu0 0.0
        %520 = vmatpush1.msra.mxu0 0.0
        %521 = vmatprep.subr.mxu0 0.0
        %522 = vmatpush1.msra.mxu0 0.0
        %523 = vmatprep.subr.mxu0 0.0
        %524 = vmatpush1.msra.mxu0 0.0
        %525 = vmatprep.subr.mxu0 0.0
        %526 = vmatpush1.msra.mxu0 0.0
        %527 = vmatprep.subr.mxu0 0.0
        %528 = vmatpush1.msra.mxu0 0.0
        %529 = vmatprep.subr.mxu0 0.0
        %530 = vmatpush1.msra.mxu0 0.0
        %531 = vmatprep.subr.mxu0 0.0
        %532 = vmatpush1.msra.mxu0 0.0
        %533 = vmatprep.subr.mxu0 0.0
        %534 = vmatpush1.msra.mxu0 0.0
        %535 = vmatprep.subr.mxu0 0.0
        %536 = vmatpush1.msra.mxu0 0.0
        %537 = vmatprep.subr.mxu0 0.0
        %538 = vmatpush1.msra.mxu0 0.0
        %539 = vmatprep.subr.mxu0 0.0
        %540 = vmatpush1.msra.mxu0 0.0
        %541 = vmatprep.subr.mxu0 0.0
        %542 = vmatpush1.msra.mxu0 0.0
        %543 = vmatprep.subr.mxu0 0.0
        %544 = vmatpush1.msra.mxu0 0.0
        %545 = vmatprep.subr.mxu0 0.0
        %546 = vmatpush1.msra.mxu0 0.0
        %547 = vmatprep.subr.mxu0 0.0
        %548 = vmatpush1.msra.mxu0 0.0
        %549 = vmatprep.subr.mxu0 0.0
        %550 = vmatpush1.msra.mxu0 0.0
        %551 = vmatprep.subr.mxu0 0.0
        %552 = vmatpush1.msra.mxu0 0.0
        %553 = vmatprep.subr.mxu0 0.0
        %554 = vmatpush1.msra.mxu0 0.0
        %555 = vmatprep.subr.mxu0 0.0
        %556 = vmatpush1.msra.mxu0 0.0
        %557 = vmatprep.subr.mxu0 0.0
        %558 = vmatpush1.msra.mxu0 0.0
        %559 = vmatprep.subr.mxu0 0.0
        %560 = vmatpush1.msra.mxu0 0.0
        %561 = vmatprep.subr.mxu0 0.0
        %562 = vmatpush1.msra.mxu0 0.0
        %563 = vmatprep.mubr.f32.mxu0 0.0
        %564 = vmatmul.mubr.f32.gmra.mrb[0].mxu0 %v494
        %v565 = vpop.f32.mrb[0].mxu0
        %v566 = vadd.f32 0.0, %v565
        %v567 = vpop.f32.mrb[0].mxu0
        %568 = vdwg.mxu0
        %v569 = vadd.f32 %v486, %v566
        %s570 = scalar_lea.vmem %s241, 32
        %v571 = vld [vmem:[%s570] sm:$0xff]
        %572 = vrot.lane.b32.xlu0 %v490, 127
        %v573 = vpop.permute.xlu0 %572
        %v575 = vsel %vm255, %v571, 0
        %v577 = vsel %vm259, %v573, 0
        %579 = vmatprep.subr.mxu0 0.0
        %580 = vmatpush1.msra.mxu0 %v577
        %581 = vmatprep.subr.mxu0 0.0
        %582 = vmatpush1.msra.mxu0 0.0
        %583 = vmatprep.subr.mxu0 0.0
        %584 = vmatpush1.msra.mxu0 0.0
        %585 = vmatprep.subr.mxu0 0.0
        %586 = vmatpush1.msra.mxu0 0.0
        %587 = vmatprep.subr.mxu0 0.0
        %588 = vmatpush1.msra.mxu0 0.0
        %589 = vmatprep.subr.mxu0 0.0
        %590 = vmatpush1.msra.mxu0 0.0
        %591 = vmatprep.subr.mxu0 0.0
        %592 = vmatpush1.msra.mxu0 0.0
        %593 = vmatprep.subr.mxu0 0.0
        %594 = vmatpush1.msra.mxu0 0.0
        %595 = vmatprep.subr.mxu0 0.0
        %596 = vmatpush1.msra.mxu0 0.0
        %597 = vmatprep.subr.mxu0 0.0
        %598 = vmatpush1.msra.mxu0 0.0
        %599 = vmatprep.subr.mxu0 0.0
        %600 = vmatpush1.msra.mxu0 0.0
        %601 = vmatprep.subr.mxu0 0.0
        %602 = vmatpush1.msra.mxu0 0.0
        %603 = vmatprep.subr.mxu0 0.0
        %604 = vmatpush1.msra.mxu0 0.0
        %605 = vmatprep.subr.mxu0 0.0
        %606 = vmatpush1.msra.mxu0 0.0
        %607 = vmatprep.subr.mxu0 0.0
        %608 = vmatpush1.msra.mxu0 0.0
        %609 = vmatprep.subr.mxu0 0.0
        %610 = vmatpush1.msra.mxu0 0.0
        %611 = vmatprep.subr.mxu0 0.0
        %612 = vmatpush1.msra.mxu0 0.0
        %613 = vmatprep.subr.mxu0 0.0
        %614 = vmatpush1.msra.mxu0 0.0
        %615 = vmatprep.subr.mxu0 0.0
        %616 = vmatpush1.msra.mxu0 0.0
        %617 = vmatprep.subr.mxu0 0.0
        %618 = vmatpush1.msra.mxu0 0.0
        %619 = vmatprep.subr.mxu0 0.0
        %620 = vmatpush1.msra.mxu0 0.0
        %621 = vmatprep.subr.mxu0 0.0
        %622 = vmatpush1.msra.mxu0 0.0
        %623 = vmatprep.subr.mxu0 0.0
        %624 = vmatpush1.msra.mxu0 0.0
        %625 = vmatprep.subr.mxu0 0.0
        %626 = vmatpush1.msra.mxu0 0.0
        %627 = vmatprep.subr.mxu0 0.0
        %628 = vmatpush1.msra.mxu0 0.0
        %629 = vmatprep.subr.mxu0 0.0
        %630 = vmatpush1.msra.mxu0 0.0
        %631 = vmatprep.subr.mxu0 0.0
        %632 = vmatpush1.msra.mxu0 0.0
        %633 = vmatprep.subr.mxu0 0.0
        %634 = vmatpush1.msra.mxu0 0.0
        %635 = vmatprep.subr.mxu0 0.0
        %636 = vmatpush1.msra.mxu0 0.0
        %637 = vmatprep.subr.mxu0 0.0
        %638 = vmatpush1.msra.mxu0 0.0
        %639 = vmatprep.subr.mxu0 0.0
        %640 = vmatpush1.msra.mxu0 0.0
        %641 = vmatprep.subr.mxu0 0.0
        %642 = vmatpush1.msra.mxu0 0.0
        %643 = vmatprep.mubr.f32.mxu0 0.0
        %644 = vmatmul.mubr.f32.gmra.mrb[0].mxu0 %v575
        %v645 = vpop.f32.mrb[0].mxu0
        %v646 = vadd.f32 0.0, %v645
        %v647 = vpop.f32.mrb[0].mxu0
        %648 = vdwg.mxu0
        %v649 = vadd.f32 %v569, %v646
        %s650 = scalar_lea.vmem %s241, 40
        %v651 = vld [vmem:[%s650] sm:$0xff]
        %652 = vrot.lane.b32.xlu0 %v490, 126
        %v653 = vpop.permute.xlu0 %652
        %v655 = vsel %vm255, %v651, 0
        %v657 = vsel %vm259, %v653, 0
        %659 = vmatprep.subr.mxu0 0.0
        %660 = vmatpush1.msra.mxu0 %v657
        %661 = vmatprep.subr.mxu0 0.0
        %662 = vmatpush1.msra.mxu0 0.0
        %663 = vmatprep.subr.mxu0 0.0
        %664 = vmatpush1.msra.mxu0 0.0
        %665 = vmatprep.subr.mxu0 0.0
        %666 = vmatpush1.msra.mxu0 0.0
        %667 = vmatprep.subr.mxu0 0.0
        %668 = vmatpush1.msra.mxu0 0.0
        %669 = vmatprep.subr.mxu0 0.0
        %670 = vmatpush1.msra.mxu0 0.0
        %671 = vmatprep.subr.mxu0 0.0
        %672 = vmatpush1.msra.mxu0 0.0
        %673 = vmatprep.subr.mxu0 0.0
        %674 = vmatpush1.msra.mxu0 0.0
        %675 = vmatprep.subr.mxu0 0.0
        %676 = vmatpush1.msra.mxu0 0.0
        %677 = vmatprep.subr.mxu0 0.0
        %678 = vmatpush1.msra.mxu0 0.0
        %679 = vmatprep.subr.mxu0 0.0
        %680 = vmatpush1.msra.mxu0 0.0
        %681 = vmatprep.subr.mxu0 0.0
        %682 = vmatpush1.msra.mxu0 0.0
        %683 = vmatprep.subr.mxu0 0.0
        %684 = vmatpush1.msra.mxu0 0.0
        %685 = vmatprep.subr.mxu0 0.0
        %686 = vmatpush1.msra.mxu0 0.0
        %687 = vmatprep.subr.mxu0 0.0
        %688 = vmatpush1.msra.mxu0 0.0
        %689 = vmatprep.subr.mxu0 0.0
        %690 = vmatpush1.msra.mxu0 0.0
        %691 = vmatprep.subr.mxu0 0.0
        %692 = vmatpush1.msra.mxu0 0.0
        %693 = vmatprep.subr.mxu0 0.0
        %694 = vmatpush1.msra.mxu0 0.0
        %695 = vmatprep.subr.mxu0 0.0
        %696 = vmatpush1.msra.mxu0 0.0
        %697 = vmatprep.subr.mxu0 0.0
        %698 = vmatpush1.msra.mxu0 0.0
        %699 = vmatprep.subr.mxu0 0.0
        %700 = vmatpush1.msra.mxu0 0.0
        %701 = vmatprep.subr.mxu0 0.0
        %702 = vmatpush1.msra.mxu0 0.0
        %703 = vmatprep.subr.mxu0 0.0
        %704 = vmatpush1.msra.mxu0 0.0
        %705 = vmatprep.subr.mxu0 0.0
        %706 = vmatpush1.msra.mxu0 0.0
        %707 = vmatprep.subr.mxu0 0.0
        %708 = vmatpush1.msra.mxu0 0.0
        %709 = vmatprep.subr.mxu0 0.0
        %710 = vmatpush1.msra.mxu0 0.0
        %711 = vmatprep.subr.mxu0 0.0
        %712 = vmatpush1.msra.mxu0 0.0
        %713 = vmatprep.subr.mxu0 0.0
        %714 = vmatpush1.msra.mxu0 0.0
        %715 = vmatprep.subr.mxu0 0.0
        %716 = vmatpush1.msra.mxu0 0.0
        %717 = vmatprep.subr.mxu0 0.0
        %718 = vmatpush1.msra.mxu0 0.0
        %719 = vmatprep.subr.mxu0 0.0
        %720 = vmatpush1.msra.mxu0 0.0
        %721 = vmatprep.subr.mxu0 0.0
        %722 = vmatpush1.msra.mxu0 0.0
        %723 = vmatprep.mubr.f32.mxu0 0.0
        %724 = vmatmul.mubr.f32.gmra.mrb[0].mxu0 %v655
        %v725 = vpop.f32.mrb[0].mxu0
        %v726 = vadd.f32 0.0, %v725
        %v727 = vpop.f32.mrb[0].mxu0
        %728 = vdwg.mxu0
        %v729 = vadd.f32 %v649, %v726
        %s730 = sadd.s32 %s27, 2
        %s731 = smul.u32 %s730, 4
        %s732 = scalar_lea.vmem %s207, %s731 [#allocation2]
        %v733 = vld [vmem:[%s732] sm:$0xf]
        %s734 = scalar_lea.vmem %s241, 48
        %v735 = vld [vmem:[%s734] sm:$0xff]
        %v737 = vsel %vm255, %v735, 0
        %v740 = vsel %vm259, %v733, 0
        %742 = vmatprep.subr.mxu0 0.0
        %743 = vmatpush1.msra.mxu0 %v740
        %744 = vmatprep.subr.mxu0 0.0
        %745 = vmatpush1.msra.mxu0 0.0
        %746 = vmatprep.subr.mxu0 0.0
        %747 = vmatpush1.msra.mxu0 0.0
        %748 = vmatprep.subr.mxu0 0.0
        %749 = vmatpush1.msra.mxu0 0.0
        %750 = vmatprep.subr.mxu0 0.0
        %751 = vmatpush1.msra.mxu0 0.0
        %752 = vmatprep.subr.mxu0 0.0
        %753 = vmatpush1.msra.mxu0 0.0
        %754 = vmatprep.subr.mxu0 0.0
        %755 = vmatpush1.msra.mxu0 0.0
        %756 = vmatprep.subr.mxu0 0.0
        %757 = vmatpush1.msra.mxu0 0.0
        %758 = vmatprep.subr.mxu0 0.0
        %759 = vmatpush1.msra.mxu0 0.0
        %760 = vmatprep.subr.mxu0 0.0
        %761 = vmatpush1.msra.mxu0 0.0
        %762 = vmatprep.subr.mxu0 0.0
        %763 = vmatpush1.msra.mxu0 0.0
        %764 = vmatprep.subr.mxu0 0.0
        %765 = vmatpush1.msra.mxu0 0.0
        %766 = vmatprep.subr.mxu0 0.0
        %767 = vmatpush1.msra.mxu0 0.0
        %768 = vmatprep.subr.mxu0 0.0
        %769 = vmatpush1.msra.mxu0 0.0
        %770 = vmatprep.subr.mxu0 0.0
        %771 = vmatpush1.msra.mxu0 0.0
        %772 = vmatprep.subr.mxu0 0.0
        %773 = vmatpush1.msra.mxu0 0.0
        %774 = vmatprep.subr.mxu0 0.0
        %775 = vmatpush1.msra.mxu0 0.0
        %776 = vmatprep.subr.mxu0 0.0
        %777 = vmatpush1.msra.mxu0 0.0
        %778 = vmatprep.subr.mxu0 0.0
        %779 = vmatpush1.msra.mxu0 0.0
        %780 = vmatprep.subr.mxu0 0.0
        %781 = vmatpush1.msra.mxu0 0.0
        %782 = vmatprep.subr.mxu0 0.0
        %783 = vmatpush1.msra.mxu0 0.0
        %784 = vmatprep.subr.mxu0 0.0
        %785 = vmatpush1.msra.mxu0 0.0
        %786 = vmatprep.subr.mxu0 0.0
        %787 = vmatpush1.msra.mxu0 0.0
        %788 = vmatprep.subr.mxu0 0.0
        %789 = vmatpush1.msra.mxu0 0.0
        %790 = vmatprep.subr.mxu0 0.0
        %791 = vmatpush1.msra.mxu0 0.0
        %792 = vmatprep.subr.mxu0 0.0
        %793 = vmatpush1.msra.mxu0 0.0
        %794 = vmatprep.subr.mxu0 0.0
        %795 = vmatpush1.msra.mxu0 0.0
        %796 = vmatprep.subr.mxu0 0.0
        %797 = vmatpush1.msra.mxu0 0.0
        %798 = vmatprep.subr.mxu0 0.0
        %799 = vmatpush1.msra.mxu0 0.0
        %800 = vmatprep.subr.mxu0 0.0
        %801 = vmatpush1.msra.mxu0 0.0
        %802 = vmatprep.subr.mxu0 0.0
        %803 = vmatpush1.msra.mxu0 0.0
        %804 = vmatprep.subr.mxu0 0.0
        %805 = vmatpush1.msra.mxu0 0.0
        %806 = vmatprep.mubr.f32.mxu0 0.0
        %807 = vmatmul.mubr.f32.gmra.mrb[0].mxu0 %v737
        %v808 = vpop.f32.mrb[0].mxu0
        %v809 = vadd.f32 0.0, %v808
        %v810 = vpop.f32.mrb[0].mxu0
        %811 = vdwg.mxu0
        %v812 = vadd.f32 %v729, %v809
        %s813 = scalar_lea.vmem %s241, 56
        %v814 = vld [vmem:[%s813] sm:$0xff]
        %815 = vrot.lane.b32.xlu0 %v733, 127
        %v816 = vpop.permute.xlu0 %815
        %v818 = vsel %vm255, %v814, 0
        %v820 = vsel %vm259, %v816, 0
        %822 = vmatprep.subr.mxu0 0.0
        %823 = vmatpush1.msra.mxu0 %v820
        %824 = vmatprep.subr.mxu0 0.0
        %825 = vmatpush1.msra.mxu0 0.0
        %826 = vmatprep.subr.mxu0 0.0
        %827 = vmatpush1.msra.mxu0 0.0
        %828 = vmatprep.subr.mxu0 0.0
        %829 = vmatpush1.msra.mxu0 0.0
        %830 = vmatprep.subr.mxu0 0.0
        %831 = vmatpush1.msra.mxu0 0.0
        %832 = vmatprep.subr.mxu0 0.0
        %833 = vmatpush1.msra.mxu0 0.0
        %834 = vmatprep.subr.mxu0 0.0
        %835 = vmatpush1.msra.mxu0 0.0
        %836 = vmatprep.subr.mxu0 0.0
        %837 = vmatpush1.msra.mxu0 0.0
        %838 = vmatprep.subr.mxu0 0.0
        %839 = vmatpush1.msra.mxu0 0.0
        %840 = vmatprep.subr.mxu0 0.0
        %841 = vmatpush1.msra.mxu0 0.0
        %842 = vmatprep.subr.mxu0 0.0
        %843 = vmatpush1.msra.mxu0 0.0
        %844 = vmatprep.subr.mxu0 0.0
        %845 = vmatpush1.msra.mxu0 0.0
        %846 = vmatprep.subr.mxu0 0.0
        %847 = vmatpush1.msra.mxu0 0.0
        %848 = vmatprep.subr.mxu0 0.0
        %849 = vmatpush1.msra.mxu0 0.0
        %850 = vmatprep.subr.mxu0 0.0
        %851 = vmatpush1.msra.mxu0 0.0
        %852 = vmatprep.subr.mxu0 0.0
        %853 = vmatpush1.msra.mxu0 0.0
        %854 = vmatprep.subr.mxu0 0.0
        %855 = vmatpush1.msra.mxu0 0.0
        %856 = vmatprep.subr.mxu0 0.0
        %857 = vmatpush1.msra.mxu0 0.0
        %858 = vmatprep.subr.mxu0 0.0
        %859 = vmatpush1.msra.mxu0 0.0
        %860 = vmatprep.subr.mxu0 0.0
        %861 = vmatpush1.msra.mxu0 0.0
        %862 = vmatprep.subr.mxu0 0.0
        %863 = vmatpush1.msra.mxu0 0.0
        %864 = vmatprep.subr.mxu0 0.0
        %865 = vmatpush1.msra.mxu0 0.0
        %866 = vmatprep.subr.mxu0 0.0
        %867 = vmatpush1.msra.mxu0 0.0
        %868 = vmatprep.subr.mxu0 0.0
        %869 = vmatpush1.msra.mxu0 0.0
        %870 = vmatprep.subr.mxu0 0.0
        %871 = vmatpush1.msra.mxu0 0.0
        %872 = vmatprep.subr.mxu0 0.0
        %873 = vmatpush1.msra.mxu0 0.0
        %874 = vmatprep.subr.mxu0 0.0
        %875 = vmatpush1.msra.mxu0 0.0
        %876 = vmatprep.subr.mxu0 0.0
        %877 = vmatpush1.msra.mxu0 0.0
        %878 = vmatprep.subr.mxu0 0.0
        %879 = vmatpush1.msra.mxu0 0.0
        %880 = vmatprep.subr.mxu0 0.0
        %881 = vmatpush1.msra.mxu0 0.0
        %882 = vmatprep.subr.mxu0 0.0
        %883 = vmatpush1.msra.mxu0 0.0
        %884 = vmatprep.subr.mxu0 0.0
        %885 = vmatpush1.msra.mxu0 0.0
        %886 = vmatprep.mubr.f32.mxu0 0.0
        %887 = vmatmul.mubr.f32.gmra.mrb[0].mxu0 %v818
        %v888 = vpop.f32.mrb[0].mxu0
        %v889 = vadd.f32 0.0, %v888
        %v890 = vpop.f32.mrb[0].mxu0
        %891 = vdwg.mxu0
        %v892 = vadd.f32 %v812, %v889
        %s893 = scalar_lea.vmem %s241, 64
        %v894 = vld [vmem:[%s893] sm:$0xff]
        %895 = vrot.lane.b32.xlu0 %v733, 126
        %v896 = vpop.permute.xlu0 %895
        %v898 = vsel %vm255, %v894, 0
        %v900 = vsel %vm259, %v896, 0
        %902 = vmatprep.subr.mxu0 0.0
        %903 = vmatpush1.msra.mxu0 %v900
        %904 = vmatprep.subr.mxu0 0.0
        %905 = vmatpush1.msra.mxu0 0.0
        %906 = vmatprep.subr.mxu0 0.0
        %907 = vmatpush1.msra.mxu0 0.0
        %908 = vmatprep.subr.mxu0 0.0
        %909 = vmatpush1.msra.mxu0 0.0
        %910 = vmatprep.subr.mxu0 0.0
        %911 = vmatpush1.msra.mxu0 0.0
        %912 = vmatprep.subr.mxu0 0.0
        %913 = vmatpush1.msra.mxu0 0.0
        %914 = vmatprep.subr.mxu0 0.0
        %915 = vmatpush1.msra.mxu0 0.0
        %916 = vmatprep.subr.mxu0 0.0
        %917 = vmatpush1.msra.mxu0 0.0
        %918 = vmatprep.subr.mxu0 0.0
        %919 = vmatpush1.msra.mxu0 0.0
        %920 = vmatprep.subr.mxu0 0.0
        %921 = vmatpush1.msra.mxu0 0.0
        %922 = vmatprep.subr.mxu0 0.0
        %923 = vmatpush1.msra.mxu0 0.0
        %924 = vmatprep.subr.mxu0 0.0
        %925 = vmatpush1.msra.mxu0 0.0
        %926 = vmatprep.subr.mxu0 0.0
        %927 = vmatpush1.msra.mxu0 0.0
        %928 = vmatprep.subr.mxu0 0.0
        %929 = vmatpush1.msra.mxu0 0.0
        %930 = vmatprep.subr.mxu0 0.0
        %931 = vmatpush1.msra.mxu0 0.0
        %932 = vmatprep.subr.mxu0 0.0
        %933 = vmatpush1.msra.mxu0 0.0
        %934 = vmatprep.subr.mxu0 0.0
        %935 = vmatpush1.msra.mxu0 0.0
        %936 = vmatprep.subr.mxu0 0.0
        %937 = vmatpush1.msra.mxu0 0.0
        %938 = vmatprep.subr.mxu0 0.0
        %939 = vmatpush1.msra.mxu0 0.0
        %940 = vmatprep.subr.mxu0 0.0
        %941 = vmatpush1.msra.mxu0 0.0
        %942 = vmatprep.subr.mxu0 0.0
        %943 = vmatpush1.msra.mxu0 0.0
        %944 = vmatprep.subr.mxu0 0.0
        %945 = vmatpush1.msra.mxu0 0.0
        %946 = vmatprep.subr.mxu0 0.0
        %947 = vmatpush1.msra.mxu0 0.0
        %948 = vmatprep.subr.mxu0 0.0
        %949 = vmatpush1.msra.mxu0 0.0
        %950 = vmatprep.subr.mxu0 0.0
        %951 = vmatpush1.msra.mxu0 0.0
        %952 = vmatprep.subr.mxu0 0.0
        %953 = vmatpush1.msra.mxu0 0.0
        %954 = vmatprep.subr.mxu0 0.0
        %955 = vmatpush1.msra.mxu0 0.0
        %956 = vmatprep.subr.mxu0 0.0
        %957 = vmatpush1.msra.mxu0 0.0
        %958 = vmatprep.subr.mxu0 0.0
        %959 = vmatpush1.msra.mxu0 0.0
        %960 = vmatprep.subr.mxu0 0.0
        %961 = vmatpush1.msra.mxu0 0.0
        %962 = vmatprep.subr.mxu0 0.0
        %963 = vmatpush1.msra.mxu0 0.0
        %964 = vmatprep.subr.mxu0 0.0
        %965 = vmatpush1.msra.mxu0 0.0
        %966 = vmatprep.mubr.f32.mxu0 0.0
        %967 = vmatmul.mubr.f32.gmra.mrb[0].mxu0 %v898
        %v968 = vpop.f32.mrb[0].mxu0
        %v969 = vadd.f32 0.0, %v968
        %v970 = vpop.f32.mrb[0].mxu0
        %971 = vdwg.mxu0
        %v972 = vadd.f32 %v892, %v969
        %v973 = vld [vmem:[%s245] sm:$0xff]
        %975 = vset.pattern.permute.xlu0 0
        %976 = vperm.xlu0 %975, %v973
        %v977 = vpop.permute.xlu0 %976
        %v979 = vadd.f32 %v972, %v977
        %vm980 = vcmask 113664
        %981 = vst.msk [vmem:[%s237] sm:$0xff] %vm980, %v979
        %s982 = sand.u32 %s129, 1
        %s983 = scalar_lea.sflag [#allocation4], %s982
        %s984 = sand.u32 %s129, 1
        %s985 = smul.addr %s984, 8
        %s986 = scalar_lea.vmem [#allocation5], %s985
        // Predicated region
        $region37: #{tpu_custom_call.1} parent=31 // pred_check
          %p987 = pneg %p139
        $region38: #{tpu_custom_call.1} parent=31 // pred_check_branch
          %989 = sbr.rel (%p987) target = $region40
        $region39: #{tpu_custom_call.1} parent=31 // pred_region
          %s991 = ssub.s32 128, 128
          %992 = vsyncadd %s983, %s991
          %s993 = sadd.s32 %s26, %s27
          %s994 = smul.addr %s25, 14
          %s995 = sadd.s32 %s993, %s994
          %s996 = smul.addr %s995, 128
          %s997 = scalar_lea.hbm %s3, %s996
          %s999 = sshll.u32 %s986, 4
          %s1000 = int_to_ptr.vmem [resolvable:$true] %s999
          %1002 = dma.vmem_to_hbm [thread:$0]  %s1000, 128, %s997, %s983
        $region40: #{tpu_custom_call.1} parent=31 // pred_fallthru
          _
      $region32: #{tpu_custom_call.1} parent=5 // pred_fallthru
        _
      %p1003 = scmp.le.s32.totalorder 2, %s15
      // Predicated region
      $region41: #{tpu_custom_call.1} parent=5 // pred_check
        %p1004 = pneg %p1003
      $region42: #{tpu_custom_call.1} parent=5 // pred_check_branch
        %1006 = sbr.rel (%p1004) target = $region44
      $region43: #{tpu_custom_call.1} parent=5 // pred_region
        %s1007 = ssub.s32 %s15, 2
        // Predicated region
        $region45: #{tpu_custom_call.1} parent=43 // pred_check
          %p1008 = pneg %p145
        $region46: #{tpu_custom_call.1} parent=43 // pred_check_branch
          %1010 = sbr.rel (%p1008) target = $region48
        $region47: #{tpu_custom_call.1} parent=43 // pred_region
          %s1011 = sand.u32 %s130, 1
          %s1012 = scalar_lea.sflag [#allocation4], %s1011
          %s1013 = sand.u32 %s130, 1
          %s1014 = smul.addr %s1013, 8
          %s1015 = scalar_lea.vmem [#allocation5], %s1014
          %1016 = dma.done %s1012, 128
        $region48: #{tpu_custom_call.1} parent=43 // pred_fallthru
          _
      $region44: #{tpu_custom_call.1} parent=5 // pred_fallthru
        _
    $region6: #{tpu_custom_call.1} parent=1 // loop_footer
      %s19 = sadd.s32 1, %s15
    $region7: #{tpu_custom_call.1} parent=1 // loop_footer_branch
      %14 = sbr.rel target = $region3
    $region8: #{tpu_custom_call.1} parent=1 // loop_exit
      _
    %1017 = vsyncpa [#allocation3], 1
    %s1018 = scalar_lea.sflag [#allocation3], 1
    %1019 = vsyncpa %s1018, 1
    %1020 = vsyncpa [#allocation4], 1
    %s1021 = scalar_lea.sflag [#allocation4], 1
    %1022 = vsyncpa %s1021, 1

</llo_original>
